<compile_context>
chip_gen: v7x
topology: tpu7x:2x2x1
jax: 0.10.0
libtpu: 0.0.40
codegen_flags: <defaults>
</compile_context>

<pallas_src>
import jax
import jax.numpy as jnp
from jax.experimental import pallas as pl
from jax.experimental.pallas import tpu as pltpu


LN_EPS = 1e-5  # PyTorch nn.LayerNorm default eps


def _round_up(x, m):
    return pl.cdiv(x, m) * m


def _vmem_capacity_bytes():
    """Physical VMEM per TensorCore (64 MiB on v7x, 128 MiB on v5e/v6e)."""
    try:
        info = pltpu.get_tpu_info()
        for attr in ("vmem_capacity_bytes", "vmem_bytes", "vmem_size_bytes"):
            v = getattr(info, attr, None)
            if v:
                return int(v)
    except Exception:
        pass
    return 64 * 1024 * 1024  # conservative fallback (v7x per-TC)


def mlm_mlp_kernel(x_ref, w1_ref, b1_ref, gamma_ref, beta_ref,
                   w2_ref, b2_ref, o_ref, h_ref):
    # x_ref:    (TM, D_in) bf16      w1_ref: (D_in, H) bf16
    # b1/gamma/beta: (1, H) f32      w2_ref: (H, TN)   bf16
    # b2_ref:   (1, TN) f32          o_ref:  (TM, TN)  out_dtype
    # h_ref:    (TM, H) bf16 scratch (LayerNorm'd hidden, reused across TN tiles)
    j = pl.program_id(1)

    @pl.when(j == 0)
    def _compute_hidden():
        # Linear 1 on the MXU (bf16 operands, f32 accumulation) + bias.
        h = jnp.dot(x_ref[...], w1_ref[...],
                    preferred_element_type=jnp.float32) + b1_ref[...]
        # ReLU
        h = jnp.maximum(h, 0.0)
        # Two-pass LayerNorm over the hidden axis (f32, biased variance), for
        # parity with nn.LayerNorm; only runs once per row tile (j == 0).
        inv_n = 1.0 / h.shape[-1]
        mean = jnp.sum(h, axis=-1, keepdims=True) * inv_n
        centered = h - mean
        var = jnp.sum(centered * centered, axis=-1, keepdims=True) * inv_n
        h = centered * jax.lax.rsqrt(var + LN_EPS)
        h = h * gamma_ref[...] + beta_ref[...]
        h_ref[...] = h.astype(jnp.bfloat16)

    # Linear 2 on the MXU for this vocab tile.
    o_ref[...] = (jnp.dot(h_ref[...], w2_ref[...],
                          preferred_element_type=jnp.float32)
                  + b2_ref[...]).astype(o_ref.dtype)


def init_params(key, num_inputs, num_hiddens, vocab_size):
    """Plain f32 parameters; weights stored as (in, out) == PyTorch Linear W.T."""
    k1, k2 = jax.random.split(key, 2)
    w1 = jax.random.normal(k1, (num_inputs, num_hiddens), jnp.float32) * 0.02
    b1 = jnp.zeros((1, num_hiddens), jnp.float32)
    gamma = jnp.ones((1, num_hiddens), jnp.float32)
    beta = jnp.zeros((1, num_hiddens), jnp.float32)
    w2 = jax.random.normal(k2, (num_hiddens, vocab_size), jnp.float32) * 0.02
    b2 = jnp.zeros((1, vocab_size), jnp.float32)
    return dict(w1=w1, b1=b1, gamma=gamma, beta=beta, w2=w2, b2=b2)


def prepare_params(params, *, tn=2048):
    """One-time prep (NOT per forward): pad the vocab dim of W2/b2 up to a
    multiple of the vocab tile and cast the matmul operands to bf16, so the
    per-call wrapper does zero weight traffic."""
    V = int(params["w2"].shape[1])
    tn = int(min(tn, _round_up(V, 128)))      # multiple of 128 lanes
    v_padded = int(_round_up(V, tn))
    pad_v = v_padded - V
    return dict(
        w1=params["w1"].astype(jnp.bfloat16),
        b1=params["b1"].astype(jnp.float32),
        gamma=params["gamma"].astype(jnp.float32),
        beta=params["beta"].astype(jnp.float32),
        w2=jnp.pad(params["w2"], ((0, 0), (0, pad_v))).astype(jnp.bfloat16),
        b2=jnp.pad(params["b2"], ((0, 0), (0, pad_v))).astype(jnp.float32),
        vocab_size=V,
        tn=tn,
    )


def mask_lm_forward(X, pred_positions, prepared, *, tm=1024,
                    out_dtype=jnp.float32, trim=True):
    """Pallas implementation of MaskLM.forward.

    X:               (B, S, D_in) float32
    pred_positions:  (B, P) int32
    prepared:        output of prepare_params()
    out_dtype:       jnp.float32 (module parity) or jnp.bfloat16 (halves the
                     dominant logits HBM write; recommended on v6e when the
                     downstream loss tolerates it)
    returns:         (B, P, vocab_size) logits (padded vocab if trim=False)
    """
    B, S, D_in = X.shape
    P = pred_positions.shape[1]
    w1, b1 = prepared["w1"], prepared["b1"]
    gamma, beta = prepared["gamma"], prepared["beta"]
    w2, b2 = prepared["w2"], prepared["b2"]
    V = prepared["vocab_size"]
    tn = int(prepared["tn"])
    H = w1.shape[1]
    v_padded = w2.shape[1]

    # --- glue: gather masked positions (== X[batch_idx, pred_positions]) ---
    masked_X = jnp.take_along_axis(
        X, pred_positions[..., None].astype(jnp.int32), axis=1)  # (B, P, D_in)
    rows = B * P
    x_flat = masked_X.reshape(rows, D_in)

    # --- row tile: as large as possible (bf16 min sublane tile = 16) --------
    tm = int(min(tm, _round_up(rows, 16)))
    # v7x megacore: keep >= 2 row tiles when there is enough work so the
    # "parallel" row axis feeds both TensorCores.
    while tm >= 512 and pl.cdiv(rows, tm) < 2:
        tm = int(_round_up(tm // 2, 16))

    # --- VMEM budgeting per generation (v7x 64 MiB/TC, v5e/v6e 128 MiB) -----
    out_bytes = jnp.dtype(out_dtype).itemsize
    vmem_cap = _vmem_capacity_bytes()
    vmem_limit = int(min(vmem_cap * 5 // 8, 96 * 1024 * 1024))  # ~40 MiB v7x, ~80 MiB v5e/v6e

    def vmem_est(tm_, tn_):
        return (tm_ * D_in * 2 * 2            # x tile (bf16, double-buffered)
                + D_in * H * 2                # W1 (bf16, single-buffered)
                + 3 * H * 4 + tn_ * 4 * 2     # b1/gamma/beta + b2 tile
                + H * tn_ * 2 * 2             # W2 vocab tile (bf16, double-buffered)
                + tm_ * tn_ * out_bytes * 2   # logits tile (double-buffered)
                + tm_ * H * 2)                # LN'd hidden scratch (bf16)

    budget = int(vmem_limit * 0.8)
    while (vmem_est(tm, tn) > budget and tn % 256 == 0 and tn // 2 >= 256
           and v_padded % (tn // 2) == 0):
        tn //= 2
    while vmem_est(tm, tn) > budget and tm // 2 >= 128 and (tm // 2) % 16 == 0:
        tm //= 2

    rows_padded = int(_round_up(rows, tm))
    n_row_tiles = rows_padded // tm
    n_voc_tiles = v_padded // tn

    # --- pad rows (only if needed) and cast the activation to bf16 ----------
    x_p = x_flat
    if rows_padded != rows:
        x_p = jnp.pad(x_flat, ((0, rows_padded - rows), (0, 0)))
    x_p = x_p.astype(jnp.bfloat16)

    cost = pl.CostEstimate(
        flops=2 * rows_padded * (D_in * H + H * v_padded),
        transcendentals=rows_padded,                       # one rsqrt per row
        bytes_accessed=(rows_padded * D_in * 2             # x (bf16)
                        + D_in * H * 2                     # W1 (bf16, resident)
                        + n_row_tiles * H * v_padded * 2   # W2 streamed per row tile
                        + rows_padded * v_padded * out_bytes),  # logits
    )

    def run(single_buffer_consts):
        const_kw = ({"pipeline_mode": pl.Buffered(1)}
                    if single_buffer_consts else {})
        grid_spec = pltpu.PrefetchScalarGridSpec(
            num_scalar_prefetch=0,
            grid=(n_row_tiles, n_voc_tiles),
            in_specs=[
                pl.BlockSpec((tm, D_in), lambda i, j: (i, 0)),             # masked rows
                pl.BlockSpec((D_in, H), lambda i, j: (0, 0), **const_kw),  # W1 (resident)
                pl.BlockSpec((1, H), lambda i, j: (0, 0), **const_kw),     # b1
                pl.BlockSpec((1, H), lambda i, j: (0, 0), **const_kw),     # gamma
                pl.BlockSpec((1, H), lambda i, j: (0, 0), **const_kw),     # beta
                # W2 vocab tile: the only operand that changes every inner
                # step.  Bump to pipeline_mode=pl.Buffered(3) if its DMA is
                # still exposed after the big row tile (check v7x budget).
                pl.BlockSpec((H, tn), lambda i, j: (0, j)),
                pl.BlockSpec((1, tn), lambda i, j: (0, j)),                # b2 tile
            ],
            out_specs=pl.BlockSpec((tm, tn), lambda i, j: (i, j)),
            scratch_shapes=[pltpu.VMEM((tm, H), jnp.bfloat16)],            # LN'd hidden
        )
        return pl.pallas_call(
            mlm_mlp_kernel,
            out_shape=jax.ShapeDtypeStruct((rows_padded, v_padded), out_dtype),
            grid_spec=grid_spec,
            compiler_params=pltpu.CompilerParams(
                # Row tiles are independent (megacore-shardable); the vocab
                # axis reuses the hidden-state scratch, so it runs in order.
                dimension_semantics=("parallel", "arbitrary"),
                vmem_limit_bytes=vmem_limit,
            ),
            cost_estimate=cost,
        )(x_p, w1, b1, gamma, beta, w2, b2)

    try:
        out_flat = run(True)
    except Exception:
        # pipeline_mode=pl.Buffered(1) not supported on this jax version:
        # fall back to default double-buffering for the constant operands.
        out_flat = run(False)

    if trim:
        # Free when nothing was padded (the common prepared-params case keeps
        # only the vocab padded, and rows often divide tm exactly).
        return out_flat[:rows, :V].reshape(B, P, V)
    # Production path at real vocab sizes: skip the logits slice copy and mask
    # padded vocab ids downstream (row slice is free when rows % tm == 0).
    return out_flat[:rows, :].reshape(B, P, v_padded)


if __name__ == "__main__":
    # Small shapes consistent with the module's forward:
    #   X: (batch=2, seq=16, num_inputs=128), pred_positions: (2, 8)
    #   num_hiddens=128, vocab_size=256
    B, S, D_in = 2, 16, 128
    P = 8
    H = 128
    V = 256

    key = jax.random.PRNGKey(0)
    kx, kp, kw = jax.random.split(key, 3)

    X = jax.random.normal(kx, (B, S, D_in), jnp.float32)
    pred_positions = jax.random.randint(kp, (B, P), 0, S, dtype=jnp.int32)
    params = init_params(kw, D_in, H, V)
    prepared = prepare_params(params, tn=2048)

    out = mask_lm_forward(X, pred_positions, prepared)
    out = jax.block_until_ready(out)

    # Reference check in plain JAX with the same bf16 matmul / f32-LN recipe.
    masked = jnp.take_along_axis(X, pred_positions[..., None], axis=1)
    h = jnp.dot(masked.astype(jnp.bfloat16), params["w1"].astype(jnp.bfloat16),
                preferred_element_type=jnp.float32) + params["b1"]
    h = jnp.maximum(h, 0.0)
    mu = h.mean(-1, keepdims=True)
    var = ((h - mu) ** 2).mean(-1, keepdims=True)
    h = (h - mu) * jax.lax.rsqrt(var + LN_EPS) * params["gamma"] + params["beta"]
    ref = jnp.dot(h.astype(jnp.bfloat16), params["w2"].astype(jnp.bfloat16),
                  preferred_element_type=jnp.float32) + params["b2"]

    assert out.shape == (B, P, V)
    assert jnp.allclose(out, ref, atol=2e-2, rtol=2e-2), (
        float(jnp.max(jnp.abs(out - ref))))

    print("KERNEL_OK")
</pallas_src>

<mosaic_0001>
module attributes {stable_mosaic.version = 11 : i64} {
  func.func @mlm_mlp_kernel(%arg0: i32, %arg1: i32, %arg2: memref<16x128xbf16, #tpu.memory_space<vmem>>, %arg3: memref<128x128xbf16, #tpu.memory_space<vmem>>, %arg4: memref<1x128xf32, #tpu.memory_space<vmem>>, %arg5: memref<1x128xf32, #tpu.memory_space<vmem>>, %arg6: memref<1x128xf32, #tpu.memory_space<vmem>>, %arg7: memref<128x256xbf16, #tpu.memory_space<vmem>>, %arg8: memref<1x256xf32, #tpu.memory_space<vmem>>, %arg9: memref<16x256xf32, #tpu.memory_space<vmem>>, %arg10: memref<16x128xbf16, #tpu.memory_space<vmem>>) attributes {dimension_semantics = [#tpu.dimension_semantics<parallel>, #tpu.dimension_semantics<arbitrary>], iteration_bounds = array<i64: 1, 1>, scalar_prefetch = 0 : i64, scratch_operands = 1 : i64, tpu.core_type = #tpu.core_type<tc>, window_params = [{transform_indices = @transform_0, window_bounds = array<i64: 16, 128>}, {pipeline_mode = #tpu.pipeline_mode<synchronous>, transform_indices = @transform_1, window_bounds = array<i64: 128, 128>}, {pipeline_mode = #tpu.pipeline_mode<synchronous>, transform_indices = @transform_2, window_bounds = array<i64: 1, 128>}, {pipeline_mode = #tpu.pipeline_mode<synchronous>, transform_indices = @transform_3, window_bounds = array<i64: 1, 128>}, {pipeline_mode = #tpu.pipeline_mode<synchronous>, transform_indices = @transform_4, window_bounds = array<i64: 1, 128>}, {transform_indices = @transform_5, window_bounds = array<i64: 128, 256>}, {transform_indices = @transform_6, window_bounds = array<i64: 1, 256>}, {transform_indices = @transform_7, window_bounds = array<i64: 16, 256>}]} {
    %c0_i32 = arith.constant 0 : i32
    %0 = arith.cmpi eq, %arg1, %c0_i32 : i32
    %1 = arith.extui %0 : i1 to i32
    %c0_i32_0 = arith.constant 0 : i32
    %2 = arith.cmpi ne, %1, %c0_i32_0 : i32
    scf.if %2 {
      %c0_8 = arith.constant 0 : index
      %c0_9 = arith.constant 0 : index
      %10 = vector.load %arg2[%c0_8, %c0_9] : memref<16x128xbf16, #tpu.memory_space<vmem>>, vector<16x128xbf16>
      %c0_10 = arith.constant 0 : index
      %c0_11 = arith.constant 0 : index
      %11 = vector.load %arg3[%c0_10, %c0_11] : memref<128x128xbf16, #tpu.memory_space<vmem>>, vector<128x128xbf16>
      %cst_12 = arith.constant dense<0.000000e+00> : vector<16x128xf32>
      %12 = tpu.matmul %10, %11, %cst_12 {dimension_numbers = #tpu.dot_dimension_numbers<[1], [0], [0], [1], [0, 0, 1, 1], [], []>} : vector<16x128xbf16>, vector<128x128xbf16>, vector<16x128xf32> -> vector<16x128xf32>
      %c0_13 = arith.constant 0 : index
      %c0_14 = arith.constant 0 : index
      %13 = vector.load %arg4[%c0_13, %c0_14] : memref<1x128xf32, #tpu.memory_space<vmem>>, vector<1x128xf32>
      %14 = vector.broadcast %13 : vector<1x128xf32> to vector<16x128xf32>
      %15 = arith.addf %12, %14 : vector<16x128xf32>
      %cst_15 = arith.constant 0.000000e+00 : f32
      %16 = vector.broadcast %cst_15 : f32 to vector<16x128xf32>
      %17 = arith.maximumf %15, %16 : vector<16x128xf32>
      %cst_16 = arith.constant dense<0.000000e+00> : vector<16xf32>
      %18 = vector.multi_reduction <add>, %17, %cst_16 [1] : vector<16x128xf32> to vector<16xf32>
      %19 = vector.shape_cast %18 : vector<16xf32> to vector<16x1xf32>
      %cst_17 = arith.constant 7.812500e-03 : f32
      %20 = vector.broadcast %cst_17 : f32 to vector<16x1xf32>
      %21 = arith.mulf %19, %20 : vector<16x1xf32>
      %22 = vector.broadcast %21 : vector<16x1xf32> to vector<16x128xf32>
      %23 = arith.subf %17, %22 : vector<16x128xf32>
      %24 = arith.mulf %23, %23 : vector<16x128xf32>
      %cst_18 = arith.constant dense<0.000000e+00> : vector<16xf32>
      %25 = vector.multi_reduction <add>, %24, %cst_18 [1] : vector<16x128xf32> to vector<16xf32>
      %26 = vector.shape_cast %25 : vector<16xf32> to vector<16x1xf32>
      %cst_19 = arith.constant 7.812500e-03 : f32
      %27 = vector.broadcast %cst_19 : f32 to vector<16x1xf32>
      %28 = arith.mulf %26, %27 : vector<16x1xf32>
      %cst_20 = arith.constant 9.99999974E-6 : f32
      %29 = vector.broadcast %cst_20 : f32 to vector<16x1xf32>
      %30 = arith.addf %28, %29 : vector<16x1xf32>
      %31 = math.rsqrt %30 : vector<16x1xf32>
      %32 = vector.broadcast %31 : vector<16x1xf32> to vector<16x128xf32>
      %33 = arith.mulf %23, %32 : vector<16x128xf32>
      %c0_21 = arith.constant 0 : index
      %c0_22 = arith.constant 0 : index
      %34 = vector.load %arg5[%c0_21, %c0_22] : memref<1x128xf32, #tpu.memory_space<vmem>>, vector<1x128xf32>
      %35 = vector.broadcast %34 : vector<1x128xf32> to vector<16x128xf32>
      %36 = arith.mulf %33, %35 : vector<16x128xf32>
      %c0_23 = arith.constant 0 : index
      %c0_24 = arith.constant 0 : index
      %37 = vector.load %arg6[%c0_23, %c0_24] : memref<1x128xf32, #tpu.memory_space<vmem>>, vector<1x128xf32>
      %38 = vector.broadcast %37 : vector<1x128xf32> to vector<16x128xf32>
      %39 = arith.addf %36, %38 : vector<16x128xf32>
      %40 = arith.truncf %39 : vector<16x128xf32> to vector<16x128xbf16>
      %c0_25 = arith.constant 0 : index
      %c0_26 = arith.constant 0 : index
      %41 = vector.load %arg10[%c0_25, %c0_26] : memref<16x128xbf16, #tpu.memory_space<vmem>>, vector<16x128xbf16>
      tpu.vector_store %arg10[%c0_25, %c0_26], %40 {strides = array<i32>} : memref<16x128xbf16, #tpu.memory_space<vmem>>, vector<16x128xbf16>,
    } else {
    }
    %c0 = arith.constant 0 : index
    %c0_1 = arith.constant 0 : index
    %3 = vector.load %arg10[%c0, %c0_1] : memref<16x128xbf16, #tpu.memory_space<vmem>>, vector<16x128xbf16>
    %c0_2 = arith.constant 0 : index
    %c0_3 = arith.constant 0 : index
    %4 = vector.load %arg7[%c0_2, %c0_3] : memref<128x256xbf16, #tpu.memory_space<vmem>>, vector<128x256xbf16>
    %cst = arith.constant dense<0.000000e+00> : vector<16x256xf32>
    %5 = tpu.matmul %3, %4, %cst {dimension_numbers = #tpu.dot_dimension_numbers<[1], [0], [0], [1], [0, 0, 1, 1], [], []>} : vector<16x128xbf16>, vector<128x256xbf16>, vector<16x256xf32> -> vector<16x256xf32>
    %c0_4 = arith.constant 0 : index
    %c0_5 = arith.constant 0 : index
    %6 = vector.load %arg8[%c0_4, %c0_5] : memref<1x256xf32, #tpu.memory_space<vmem>>, vector<1x256xf32>
    %7 = vector.broadcast %6 : vector<1x256xf32> to vector<16x256xf32>
    %8 = arith.addf %5, %7 : vector<16x256xf32>
    %c0_6 = arith.constant 0 : index
    %c0_7 = arith.constant 0 : index
    %9 = vector.load %arg9[%c0_6, %c0_7] : memref<16x256xf32, #tpu.memory_space<vmem>>, vector<16x256xf32>
    tpu.vector_store %arg9[%c0_6, %c0_7], %8 {strides = array<i32>} : memref<16x256xf32, #tpu.memory_space<vmem>>, vector<16x256xf32>,
    return
  }
  func.func @transform_0(%arg0: i32, %arg1: i32) -> (i32, i32) {
    %c0_i32 = arith.constant 0 : i32
    %c0_i32_0 = arith.constant 0 : i32
    return %arg0, %c0_i32 : i32, i32
  }
  func.func @transform_1(%arg0: i32, %arg1: i32) -> (i32, i32) {
    %c0_i32 = arith.constant 0 : i32
    %c0_i32_0 = arith.constant 0 : i32
    %c0_i32_1 = arith.constant 0 : i32
    return %c0_i32, %c0_i32_0 : i32, i32
  }
  func.func @transform_2(%arg0: i32, %arg1: i32) -> (i32, i32) {
    %c0_i32 = arith.constant 0 : i32
    %c0_i32_0 = arith.constant 0 : i32
    %c0_i32_1 = arith.constant 0 : i32
    return %c0_i32, %c0_i32_0 : i32, i32
  }
  func.func @transform_3(%arg0: i32, %arg1: i32) -> (i32, i32) {
    %c0_i32 = arith.constant 0 : i32
    %c0_i32_0 = arith.constant 0 : i32
    %c0_i32_1 = arith.constant 0 : i32
    return %c0_i32, %c0_i32_0 : i32, i32
  }
  func.func @transform_4(%arg0: i32, %arg1: i32) -> (i32, i32) {
    %c0_i32 = arith.constant 0 : i32
    %c0_i32_0 = arith.constant 0 : i32
    %c0_i32_1 = arith.constant 0 : i32
    return %c0_i32, %c0_i32_0 : i32, i32
  }
  func.func @transform_5(%arg0: i32, %arg1: i32) -> (i32, i32) {
    %c0_i32 = arith.constant 0 : i32
    %c0_i32_0 = arith.constant 0 : i32
    return %c0_i32, %arg1 : i32, i32
  }
  func.func @transform_6(%arg0: i32, %arg1: i32) -> (i32, i32) {
    %c0_i32 = arith.constant 0 : i32
    %c0_i32_0 = arith.constant 0 : i32
    return %c0_i32, %arg1 : i32, i32
  }
  func.func @transform_7(%arg0: i32, %arg1: i32) -> (i32, i32) {
    %c0_i32 = arith.constant 0 : i32
    return %arg0, %arg1 : i32, i32
  }
}

module attributes {stable_mosaic.version = 11 : i64} {
  func.func @mlm_mlp_kernel(%arg0: i32, %arg1: i32, %arg2: memref<16x128xbf16, #tpu.memory_space<vmem>>, %arg3: memref<128x128xbf16, #tpu.memory_space<vmem>>, %arg4: memref<1x128xf32, #tpu.memory_space<vmem>>, %arg5: memref<1x128xf32, #tpu.memory_space<vmem>>, %arg6: memref<1x128xf32, #tpu.memory_space<vmem>>, %arg7: memref<128x256xbf16, #tpu.memory_space<vmem>>, %arg8: memref<1x256xf32, #tpu.memory_space<vmem>>, %arg9: memref<16x256xf32, #tpu.memory_space<vmem>>, %arg10: memref<16x128xbf16, #tpu.memory_space<vmem>>) attributes {dimension_semantics = [#tpu.dimension_semantics<parallel>, #tpu.dimension_semantics<arbitrary>], iteration_bounds = array<i64: 1, 1>, scalar_prefetch = 0 : i64, scratch_operands = 1 : i64, tpu.core_type = #tpu.core_type<tc>, window_params = [{transform_indices = @transform_0, window_bounds = array<i64: 16, 128>}, {pipeline_mode = #tpu.pipeline_mode<synchronous>, transform_indices = @transform_1, window_bounds = array<i64: 128, 128>}, {pipeline_mode = #tpu.pipeline_mode<synchronous>, transform_indices = @transform_2, window_bounds = array<i64: 1, 128>}, {pipeline_mode = #tpu.pipeline_mode<synchronous>, transform_indices = @transform_3, window_bounds = array<i64: 1, 128>}, {pipeline_mode = #tpu.pipeline_mode<synchronous>, transform_indices = @transform_4, window_bounds = array<i64: 1, 128>}, {transform_indices = @transform_5, window_bounds = array<i64: 128, 256>}, {transform_indices = @transform_6, window_bounds = array<i64: 1, 256>}, {transform_indices = @transform_7, window_bounds = array<i64: 16, 256>}]} {
    %c0_i32 = arith.constant 0 : i32
    %0 = arith.cmpi eq, %arg1, %c0_i32 : i32
    %1 = arith.extui %0 : i1 to i32
    %c0_i32_0 = arith.constant 0 : i32
    %2 = arith.cmpi ne, %1, %c0_i32_0 : i32
    scf.if %2 {
      %c0_8 = arith.constant 0 : index
      %c0_9 = arith.constant 0 : index
      %10 = vector.load %arg2[%c0_8, %c0_9] : memref<16x128xbf16, #tpu.memory_space<vmem>>, vector<16x128xbf16>
      %c0_10 = arith.constant 0 : index
      %c0_11 = arith.constant 0 : index
      %11 = vector.load %arg3[%c0_10, %c0_11] : memref<128x128xbf16, #tpu.memory_space<vmem>>, vector<128x128xbf16>
      %cst_12 = arith.constant dense<0.000000e+00> : vector<16x128xf32>
      %12 = tpu.matmul %10, %11, %cst_12 {dimension_numbers = #tpu.dot_dimension_numbers<[1], [0], [0], [1], [0, 0, 1, 1], [], []>} : vector<16x128xbf16>, vector<128x128xbf16>, vector<16x128xf32> -> vector<16x128xf32>
      %c0_13 = arith.constant 0 : index
      %c0_14 = arith.constant 0 : index
      %13 = vector.load %arg4[%c0_13, %c0_14] : memref<1x128xf32, #tpu.memory_space<vmem>>, vector<1x128xf32>
      %14 = vector.broadcast %13 : vector<1x128xf32> to vector<16x128xf32>
      %15 = arith.addf %12, %14 : vector<16x128xf32>
      %cst_15 = arith.constant 0.000000e+00 : f32
      %16 = vector.broadcast %cst_15 : f32 to vector<16x128xf32>
      %17 = arith.maximumf %15, %16 : vector<16x128xf32>
      %cst_16 = arith.constant dense<0.000000e+00> : vector<16xf32>
      %18 = vector.multi_reduction <add>, %17, %cst_16 [1] : vector<16x128xf32> to vector<16xf32>
      %19 = vector.shape_cast %18 : vector<16xf32> to vector<16x1xf32>
      %cst_17 = arith.constant 7.812500e-03 : f32
      %20 = vector.broadcast %cst_17 : f32 to vector<16x1xf32>
      %21 = arith.mulf %19, %20 : vector<16x1xf32>
      %22 = vector.broadcast %21 : vector<16x1xf32> to vector<16x128xf32>
      %23 = arith.subf %17, %22 : vector<16x128xf32>
      %24 = arith.mulf %23, %23 : vector<16x128xf32>
      %cst_18 = arith.constant dense<0.000000e+00> : vector<16xf32>
      %25 = vector.multi_reduction <add>, %24, %cst_18 [1] : vector<16x128xf32> to vector<16xf32>
      %26 = vector.shape_cast %25 : vector<16xf32> to vector<16x1xf32>
      %cst_19 = arith.constant 7.812500e-03 : f32
      %27 = vector.broadcast %cst_19 : f32 to vector<16x1xf32>
      %28 = arith.mulf %26, %27 : vector<16x1xf32>
      %cst_20 = arith.constant 9.99999974E-6 : f32
      %29 = vector.broadcast %cst_20 : f32 to vector<16x1xf32>
      %30 = arith.addf %28, %29 : vector<16x1xf32>
      %31 = math.rsqrt %30 : vector<16x1xf32>
      %32 = vector.broadcast %31 : vector<16x1xf32> to vector<16x128xf32>
      %33 = arith.mulf %23, %32 : vector<16x128xf32>
      %c0_21 = arith.constant 0 : index
      %c0_22 = arith.constant 0 : index
      %34 = vector.load %arg5[%c0_21, %c0_22] : memref<1x128xf32, #tpu.memory_space<vmem>>, vector<1x128xf32>
      %35 = vector.broadcast %34 : vector<1x128xf32> to vector<16x128xf32>
      %36 = arith.mulf %33, %35 : vector<16x128xf32>
      %c0_23 = arith.constant 0 : index
      %c0_24 = arith.constant 0 : index
      %37 = vector.load %arg6[%c0_23, %c0_24] : memref<1x128xf32, #tpu.memory_space<vmem>>, vector<1x128xf32>
      %38 = vector.broadcast %37 : vector<1x128xf32> to vector<16x128xf32>
      %39 = arith.addf %36, %38 : vector<16x128xf32>
      %40 = arith.truncf %39 : vector<16x128xf32> to vector<16x128xbf16>
      %c0_25 = arith.constant 0 : index
      %c0_26 = arith.constant 0 : index
      %41 = vector.load %arg10[%c0_25, %c0_26] : memref<16x128xbf16, #tpu.memory_space<vmem>>, vector<16x128xbf16>
      tpu.vector_store %arg10[%c0_25, %c0_26], %40 {strides = array<i32>} : memref<16x128xbf16, #tpu.memory_space<vmem>>, vector<16x128xbf16>,
    } else {
    }
    %c0 = arith.constant 0 : index
    %c0_1 = arith.constant 0 : index
    %3 = vector.load %arg10[%c0, %c0_1] : memref<16x128xbf16, #tpu.memory_space<vmem>>, vector<16x128xbf16>
    %c0_2 = arith.constant 0 : index
    %c0_3 = arith.constant 0 : index
    %4 = vector.load %arg7[%c0_2, %c0_3] : memref<128x256xbf16, #tpu.memory_space<vmem>>, vector<128x256xbf16>
    %cst = arith.constant dense<0.000000e+00> : vector<16x256xf32>
    %5 = tpu.matmul %3, %4, %cst {dimension_numbers = #tpu.dot_dimension_numbers<[1], [0], [0], [1], [0, 0, 1, 1], [], []>} : vector<16x128xbf16>, vector<128x256xbf16>, vector<16x256xf32> -> vector<16x256xf32>
    %c0_4 = arith.constant 0 : index
    %c0_5 = arith.constant 0 : index
    %6 = vector.load %arg8[%c0_4, %c0_5] : memref<1x256xf32, #tpu.memory_space<vmem>>, vector<1x256xf32>
    %7 = vector.broadcast %6 : vector<1x256xf32> to vector<16x256xf32>
    %8 = arith.addf %5, %7 : vector<16x256xf32>
    %c0_6 = arith.constant 0 : index
    %c0_7 = arith.constant 0 : index
    %9 = vector.load %arg9[%c0_6, %c0_7] : memref<16x256xf32, #tpu.memory_space<vmem>>, vector<16x256xf32>
    tpu.vector_store %arg9[%c0_6, %c0_7], %8 {strides = array<i32>} : memref<16x256xf32, #tpu.memory_space<vmem>>, vector<16x256xf32>,
    return
  }
  func.func @transform_0(%arg0: i32, %arg1: i32) -> (i32, i32) {
    %c0_i32 = arith.constant 0 : i32
    %c0_i32_0 = arith.constant 0 : i32
    return %arg0, %c0_i32 : i32, i32
  }
  func.func @transform_1(%arg0: i32, %arg1: i32) -> (i32, i32) {
    %c0_i32 = arith.constant 0 : i32
    %c0_i32_0 = arith.constant 0 : i32
    %c0_i32_1 = arith.constant 0 : i32
    return %c0_i32, %c0_i32_0 : i32, i32
  }
  func.func @transform_2(%arg0: i32, %arg1: i32) -> (i32, i32) {
    %c0_i32 = arith.constant 0 : i32
    %c0_i32_0 = arith.constant 0 : i32
    %c0_i32_1 = arith.constant 0 : i32
    return %c0_i32, %c0_i32_0 : i32, i32
  }
  func.func @transform_3(%arg0: i32, %arg1: i32) -> (i32, i32) {
    %c0_i32 = arith.constant 0 : i32
    %c0_i32_0 = arith.constant 0 : i32
    %c0_i32_1 = arith.constant 0 : i32
    return %c0_i32, %c0_i32_0 : i32, i32
  }
  func.func @transform_4(%arg0: i32, %arg1: i32) -> (i32, i32) {
    %c0_i32 = arith.constant 0 : i32
    %c0_i32_0 = arith.constant 0 : i32
    %c0_i32_1 = arith.constant 0 : i32
    return %c0_i32, %c0_i32_0 : i32, i32
  }
  func.func @transform_5(%arg0: i32, %arg1: i32) -> (i32, i32) {
    %c0_i32 = arith.constant 0 : i32
    %c0_i32_0 = arith.constant 0 : i32
    return %c0_i32, %arg1 : i32, i32
  }
  func.func @transform_6(%arg0: i32, %arg1: i32) -> (i32, i32) {
    %c0_i32 = arith.constant 0 : i32
    %c0_i32_0 = arith.constant 0 : i32
    return %c0_i32, %arg1 : i32, i32
  }
  func.func @transform_7(%arg0: i32, %arg1: i32) -> (i32, i32) {
    %c0_i32 = arith.constant 0 : i32
    return %arg0, %arg1 : i32, i32
  }
}

</mosaic_0001>

<llo_original>
// kernel: tpu_custom_call.1
$region0: #{tpu_custom_call.1}
  #allocation0 [shape = 'u32[]', space=smem, size = 0x4, offset = 0x4, fixed_abs, tag = 'smem constant byte address 0x4 - core index']
  #allocation1 [shape = 'u32[144,128]{1,0:T(1,128)}', space=vmem, size = 0x12000, scoped, tag = 'internal scratch']
  #allocation2 [shape = 'bf16[16,128]{1,0:T(16,128)(2,1)}', space=vmem, size = 0x1000, scoped, tag = 'scratch operand']
  %s0 = inlined_call_operand.hbm [shape: bf16[16,128], index: 0, kind: input, shape index: {}]
  %s1 = inlined_call_operand.hbm [shape: bf16[128,128], index: 1, kind: input, shape index: {}]
  %s2 = inlined_call_operand.vmem [shape: f32[1,128], index: 2, kind: input, shape index: {}]
  %s3 = inlined_call_operand.vmem [shape: f32[1,128], index: 3, kind: input, shape index: {}]
  %s4 = inlined_call_operand.vmem [shape: f32[1,128], index: 4, kind: input, shape index: {}]
  %s5 = inlined_call_operand.hbm [shape: bf16[128,256], index: 5, kind: input, shape index: {}]
  %s6 = inlined_call_operand.vmem [shape: f32[1,256], index: 6, kind: input, shape index: {}]
  %s7 = inlined_call_operand.hbm [shape: f32[16,256], index: 7, kind: output, shape index: {}]
  %s8 = sld [smem:[#allocation0]]
  $region54: #{tpu_custom_call.1} parent=0
    _
  %s10 = ssub.s32 1, %s8
  %s11 = scalar_select 0, %s10, %s8
  $region1: #{tpu_custom_call.1} parent=0
    #allocation3 [shape = 'u8[4096]{0}', space=vmem, size = 0x1000, scoped, tag = 'input window, operand 0, single buffered']
    #allocation4 [shape = 's32[1]{0}', space=sflag, size = 0x4, scoped, tag = 'scoped memory for tpu_custom_call.1']
    #allocation5 [shape = 's32[1]{0}', space=sflag, size = 0x4, scoped, tag = 'scoped memory for tpu_custom_call.1']
    #allocation6 [shape = 'u8[32768]{0}', space=vmem, size = 0x8000, scoped, tag = 'input window, operand 1, single buffered']
    #allocation7 [shape = 's32[1]{0}', space=sflag, size = 0x4, scoped, tag = 'scoped memory for tpu_custom_call.1']
    #allocation8 [shape = 'u8[65536]{0}', space=vmem, size = 0x10000, scoped, tag = 'input window, operand 5, single buffered']
    #allocation9 [shape = 'u8[16384]{0}', space=vmem, size = 0x4000, scoped, tag = 'output window, operand 0, single buffered']
    %12 = vsyncpa [#allocation4], 0
    %13 = vsyncpa [#allocation7], 0
    %14 = vsyncpa [#allocation5], 0
    // Predicated region
    $region2: #{tpu_custom_call.1} parent=1 // pred_check
      _
    $region3: #{tpu_custom_call.1} parent=1 // pred_check_branch
      %16 = sbr.rel (0) target = $region5
    $region4: #{tpu_custom_call.1} parent=1 // pred_region
      %s18 = ssub.s32 128, 128
      %19 = vsyncadd [#allocation4], %s18
      %s20 = sshll.u32 [#allocation3], 4
      %s21 = int_to_ptr.vmem [resolvable:$true] %s20
      %26 = dma.hbm_to_vmem [thread:$0]  %s0, 128, %s21, [#allocation4], 64, 64, 4
    $region5: #{tpu_custom_call.1} parent=1 // pred_fallthru
      _
    // Predicated region
    $region6: #{tpu_custom_call.1} parent=1 // pred_check
      _
    $region7: #{tpu_custom_call.1} parent=1 // pred_check_branch
      %28 = sbr.rel (0) target = $region9
    $region8: #{tpu_custom_call.1} parent=1 // pred_region
      %s30 = ssub.s32 1024, 1024
      %31 = vsyncadd [#allocation7], %s30
      %s32 = sshll.u32 [#allocation6], 4
      %s33 = int_to_ptr.vmem [resolvable:$true] %s32
      %38 = dma.hbm_to_vmem [thread:$0]  %s1, 1024, %s33, [#allocation7], 64, 64, 4
    $region9: #{tpu_custom_call.1} parent=1 // pred_fallthru
      _
    // Predicated region
    $region10: #{tpu_custom_call.1} parent=1 // pred_check
      _
    $region11: #{tpu_custom_call.1} parent=1 // pred_check_branch
      %40 = sbr.rel (0) target = $region13
    $region12: #{tpu_custom_call.1} parent=1 // pred_region
      _
    $region13: #{tpu_custom_call.1} parent=1 // pred_fallthru
      _
    // Predicated region
    $region14: #{tpu_custom_call.1} parent=1 // pred_check
      _
    $region15: #{tpu_custom_call.1} parent=1 // pred_check_branch
      %42 = sbr.rel (0) target = $region17
    $region16: #{tpu_custom_call.1} parent=1 // pred_region
      _
    $region17: #{tpu_custom_call.1} parent=1 // pred_fallthru
      _
    // Predicated region
    $region18: #{tpu_custom_call.1} parent=1 // pred_check
      _
    $region19: #{tpu_custom_call.1} parent=1 // pred_check_branch
      %44 = sbr.rel (0) target = $region21
    $region20: #{tpu_custom_call.1} parent=1 // pred_region
      _
    $region21: #{tpu_custom_call.1} parent=1 // pred_fallthru
      _
    // Predicated region
    $region22: #{tpu_custom_call.1} parent=1 // pred_check
      _
    $region23: #{tpu_custom_call.1} parent=1 // pred_check_branch
      %46 = sbr.rel (0) target = $region25
    $region24: #{tpu_custom_call.1} parent=1 // pred_region
      %s48 = ssub.s32 2048, 2048
      %49 = vsyncadd [#allocation7], %s48
      %s50 = sshll.u32 [#allocation8], 4
      %s51 = int_to_ptr.vmem [resolvable:$true] %s50
      %56 = dma.hbm_to_vmem [thread:$0]  %s5, 2048, %s51, [#allocation7], 128, 128, 8
    $region25: #{tpu_custom_call.1} parent=1 // pred_fallthru
      _
    // Predicated region
    $region26: #{tpu_custom_call.1} parent=1 // pred_check
      _
    $region27: #{tpu_custom_call.1} parent=1 // pred_check_branch
      %58 = sbr.rel (0) target = $region29
    $region28: #{tpu_custom_call.1} parent=1 // pred_region
      _
    $region29: #{tpu_custom_call.1} parent=1 // pred_fallthru
      _
    // Predicated region
    $region30: #{tpu_custom_call.1} parent=1 // pred_check
      _
    $region31: #{tpu_custom_call.1} parent=1 // pred_check_branch
      %60 = sbr.rel (0) target = $region33
    $region32: #{tpu_custom_call.1} parent=1 // pred_region
      %61 = dma.done [#allocation4], 128
    $region33: #{tpu_custom_call.1} parent=1 // pred_fallthru
      _
    // Predicated region
    $region34: #{tpu_custom_call.1} parent=1 // pred_check
      _
    $region35: #{tpu_custom_call.1} parent=1 // pred_check_branch
      %63 = sbr.rel (0) target = $region37
    $region36: #{tpu_custom_call.1} parent=1 // pred_region
      %64 = dma.done [#allocation7], 1024
    $region37: #{tpu_custom_call.1} parent=1 // pred_fallthru
      _
    // Predicated region
    $region38: #{tpu_custom_call.1} parent=1 // pred_check
      _
    $region39: #{tpu_custom_call.1} parent=1 // pred_check_branch
      %66 = sbr.rel (0) target = $region41
    $region40: #{tpu_custom_call.1} parent=1 // pred_region
      %67 = dma.done [#allocation7], 2048
    $region41: #{tpu_custom_call.1} parent=1 // pred_fallthru
      _
    %p69 = scmp.eq.s32.totalorder 0, 0
    // Predicated region
    $region42: #{tpu_custom_call.1} parent=1 // pred_check
      %p70 = pneg %p69
    $region43: #{tpu_custom_call.1} parent=1 // pred_check_branch
      %72 = sbr.rel (%p70) target = $region45
    $region44: #{tpu_custom_call.1} parent=1 // pred_region
      %v73 = vld [vmem:[#allocation3] sm:$0xf]
      %v74 = vld [vmem:[#allocation3 + $0x4] sm:$0xf]
      %v75 = vld [vmem:[#allocation6] sm:$0xf]
      %v76 = vld [vmem:[#allocation6 + $0x4] sm:$0xf]
      %v77 = vld [vmem:[#allocation6 + $0x8] sm:$0xf]
      %v78 = vld [vmem:[#allocation6 + $0xc] sm:$0xf]
      %v79 = vld [vmem:[#allocation6 + $0x10] sm:$0xf]
      %v80 = vld [vmem:[#allocation6 + $0x14] sm:$0xf]
      %v81 = vld [vmem:[#allocation6 + $0x18] sm:$0xf]
      %v82 = vld [vmem:[#allocation6 + $0x1c] sm:$0xf]
      %v83 = vld [vmem:[#allocation6 + $0x20] sm:$0xf]
      %v84 = vld [vmem:[#allocation6 + $0x24] sm:$0xf]
      %v85 = vld [vmem:[#allocation6 + $0x28] sm:$0xf]
      %v86 = vld [vmem:[#allocation6 + $0x2c] sm:$0xf]
      %v87 = vld [vmem:[#allocation6 + $0x30] sm:$0xf]
      %v88 = vld [vmem:[#allocation6 + $0x34] sm:$0xf]
      %v89 = vld [vmem:[#allocation6 + $0x38] sm:$0xf]
      %v90 = vld [vmem:[#allocation6 + $0x3c] sm:$0xf]
      %v91 = vld [vmem:[%s2] sm:$0x1]
      %v93 = vlaneseq
      %v94 = vshrl.u32 %v93, 7
      %v95 = vsub.s32 0, %v94
      %v96 = vrot.slane %v91, %v95
      %v100 = vunpack.c.l.b16 %v73
      %v101 = vunpack.c.l.b16 %v74
      %v102 = vpack.c.b16 %v101, %v100
      %v120 = vunpack.c.l.b16 %v75
      %v121 = vunpack.c.l.b16 %v76
      %v122 = vunpack.c.l.b16 %v77
      %v123 = vunpack.c.l.b16 %v78
      %v124 = vunpack.c.l.b16 %v79
      %v125 = vunpack.c.l.b16 %v80
      %v126 = vunpack.c.l.b16 %v81
      %v127 = vunpack.c.l.b16 %v82
      %v128 = vunpack.c.l.b16 %v83
      %v129 = vunpack.c.l.b16 %v84
      %v130 = vunpack.c.l.b16 %v85
      %v131 = vunpack.c.l.b16 %v86
      %v132 = vunpack.c.l.b16 %v87
      %v133 = vunpack.c.l.b16 %v88
      %v134 = vunpack.c.l.b16 %v89
      %v135 = vunpack.c.l.b16 %v90
      %v136 = vpack.c.b16 %v121, %v120
      %v137 = vpack.c.b16 %v123, %v122
      %v138 = vpack.c.b16 %v125, %v124
      %v139 = vpack.c.b16 %v127, %v126
      %v140 = vpack.c.b16 %v129, %v128
      %v141 = vpack.c.b16 %v131, %v130
      %v142 = vpack.c.b16 %v133, %v132
      %v143 = vpack.c.b16 %v135, %v134
      %152 = vmatprep.subr.bf16.mxu0 0
      %153 = vmatpush1.bf16.msra.mxu0 %v136
      %154 = vmatprep.subr.bf16.mxu0 0
      %155 = vmatpush1.bf16.msra.mxu0 %v137
      %156 = vmatprep.subr.bf16.mxu0 0
      %157 = vmatpush1.bf16.msra.mxu0 %v138
      %158 = vmatprep.subr.bf16.mxu0 0
      %159 = vmatpush1.bf16.msra.mxu0 %v139
      %160 = vmatprep.subr.bf16.mxu0 0
      %161 = vmatpush1.bf16.msra.mxu0 %v140
      %162 = vmatprep.subr.bf16.mxu0 0
      %163 = vmatpush1.bf16.msra.mxu0 %v141
      %164 = vmatprep.subr.bf16.mxu0 0
      %165 = vmatpush1.bf16.msra.mxu0 %v142
      %166 = vmatprep.subr.bf16.mxu0 0
      %167 = vmatpush1.bf16.msra.mxu0 %v143
      %168 = vmatprep.subr.bf16.mxu0 0
      %169 = vmatpush1.bf16.msra.mxu0 0
      %170 = vmatprep.subr.bf16.mxu0 0
      %171 = vmatpush1.bf16.msra.mxu0 0
      %172 = vmatprep.subr.bf16.mxu0 0
      %173 = vmatpush1.bf16.msra.mxu0 0
      %174 = vmatprep.subr.bf16.mxu0 0
      %175 = vmatpush1.bf16.msra.mxu0 0
      %176 = vmatprep.subr.bf16.mxu0 0
      %177 = vmatpush1.bf16.msra.mxu0 0
      %178 = vmatprep.subr.bf16.mxu0 0
      %179 = vmatpush1.bf16.msra.mxu0 0
      %180 = vmatprep.subr.bf16.mxu0 0
      %181 = vmatpush1.bf16.msra.mxu0 0
      %182 = vmatprep.subr.bf16.mxu0 0
      %183 = vmatpush1.bf16.msra.mxu0 0
      %184 = vmatprep.mubr.bf16.mxu0 0
      %185 = vmatmul.mubr.bf16.gmra.mrb[0].mxu0 %v102
      %v186 = vpop.f32.mrb[0].mxu0
      %v187 = vadd.f32 %v96, %v186
      %v188 = vpop.f32.mrb[0].mxu0
      %v189 = vpop.f32.mrb[0].mxu0
      %v190 = vadd.f32 %v96, %v189
      %v191 = vpop.f32.mrb[0].mxu0
      %192 = vdwg.mxu0
      %v193 = vmax.f32 %v187, 0.0
      %v194 = vmax.f32 %v190, 0.0
      %195 = vadd.xlane.f32.xlu0 %v193
      %v196 = vpop.xlane.xlu0 %195
      %197 = vadd.xlane.f32.xlu0 %v194
      %v198 = vpop.xlane.xlu0 %197
      %v199 = vmul.f32 %v196, 0.0078125
      %v200 = vmul.f32 %v198, 0.0078125
      %v201 = vsub.f32 %v193, %v199
      %v202 = vsub.f32 %v194, %v200
      %v203 = vmul.f32 %v201, %v201
      %v204 = vmul.f32 %v202, %v202
      %205 = vadd.xlane.f32.xlu0 %v203
      %v206 = vpop.xlane.xlu0 %205
      %207 = vadd.xlane.f32.xlu0 %v204
      %v208 = vpop.xlane.xlu0 %207
      %v209 = vmul.f32 %v206, 0.0078125
      %v210 = vmul.f32 %v208, 0.0078125
      %v211 = vadd.f32 %v209, 1e-05
      %v212 = vadd.f32 %v210, 1e-05
      %v213 = vrsqrt.pop %v211
      %v214 = vrsqrt.pop %v212
      %v215 = vmul.f32 %v201, %v213
      %v216 = vmul.f32 %v202, %v214
      %v217 = vld [vmem:[%s3] sm:$0x1]
      %v219 = vlaneseq
      %v220 = vshrl.u32 %v219, 7
      %v221 = vsub.s32 0, %v220
      %v222 = vrot.slane %v217, %v221
      %v224 = vmul.f32 %v215, %v222
      %v225 = vmul.f32 %v216, %v222
      %v226 = vld [vmem:[%s4] sm:$0x1]
      %v228 = vlaneseq
      %v229 = vshrl.u32 %v228, 7
      %v230 = vsub.s32 0, %v229
      %v231 = vrot.slane %v226, %v230
      %v233 = vadd.f32 %v224, %v231
      %v234 = vadd.f32 %v225, %v231
      %v235 = vpack.c.bf16 %v234, %v233
      %236 = vst [vmem:[#allocation2] sm:$0xff] %v235
    $region45: #{tpu_custom_call.1} parent=1 // pred_fallthru
      _
    %v237 = vld [vmem:[#allocation2] sm:$0xff]
    %v238 = vld [vmem:[#allocation8] sm:$0xff]
    %v239 = vld [vmem:[#allocation8 + $0x8] sm:$0xff]
    %v240 = vld [vmem:[#allocation8 + $0x10] sm:$0xff]
    %v241 = vld [vmem:[#allocation8 + $0x18] sm:$0xff]
    %v242 = vld [vmem:[#allocation8 + $0x20] sm:$0xff]
    %v243 = vld [vmem:[#allocation8 + $0x28] sm:$0xff]
    %v244 = vld [vmem:[#allocation8 + $0x30] sm:$0xff]
    %v245 = vld [vmem:[#allocation8 + $0x38] sm:$0xff]
    %v246 = vld [vmem:[#allocation8 + $0x40] sm:$0xff]
    %v247 = vld [vmem:[#allocation8 + $0x48] sm:$0xff]
    %v248 = vld [vmem:[#allocation8 + $0x50] sm:$0xff]
    %v249 = vld [vmem:[#allocation8 + $0x58] sm:$0xff]
    %v250 = vld [vmem:[#allocation8 + $0x60] sm:$0xff]
    %v251 = vld [vmem:[#allocation8 + $0x68] sm:$0xff]
    %v252 = vld [vmem:[#allocation8 + $0x70] sm:$0xff]
    %v253 = vld [vmem:[#allocation8 + $0x78] sm:$0xff]
    %v254 = vld [vmem:[%s6] sm:$0x3]
    %v256 = vlaneseq
    %v257 = vshrl.u32 %v256, 7
    %v258 = vsub.s32 0, %v257
    %v259 = vrot.slane %v254, %v258
    %v260 = vlaneseq
    %v261 = vshrl.u32 %v260, 7
    %v262 = vsub.s32 1, %v261
    %v263 = vrot.slane %v254, %v262
    %v282 = vunpack.c.l.b16 %v238
    %v283 = vunpack.c.h.b16 %v238
    %v284 = vunpack.c.l.b16 %v239
    %v285 = vunpack.c.h.b16 %v239
    %v286 = vunpack.c.l.b16 %v240
    %v287 = vunpack.c.h.b16 %v240
    %v288 = vunpack.c.l.b16 %v241
    %v289 = vunpack.c.h.b16 %v241
    %v290 = vunpack.c.l.b16 %v242
    %v291 = vunpack.c.h.b16 %v242
    %v292 = vunpack.c.l.b16 %v243
    %v293 = vunpack.c.h.b16 %v243
    %v294 = vunpack.c.l.b16 %v244
    %v295 = vunpack.c.h.b16 %v244
    %v296 = vunpack.c.l.b16 %v245
    %v297 = vunpack.c.h.b16 %v245
    %v298 = vunpack.c.l.b16 %v246
    %v299 = vunpack.c.h.b16 %v246
    %v300 = vunpack.c.l.b16 %v247
    %v301 = vunpack.c.h.b16 %v247
    %v302 = vunpack.c.l.b16 %v248
    %v303 = vunpack.c.h.b16 %v248
    %v304 = vunpack.c.l.b16 %v249
    %v305 = vunpack.c.h.b16 %v249
    %v306 = vunpack.c.l.b16 %v250
    %v307 = vunpack.c.h.b16 %v250
    %v308 = vunpack.c.l.b16 %v251
    %v309 = vunpack.c.h.b16 %v251
    %v310 = vunpack.c.l.b16 %v252
    %v311 = vunpack.c.h.b16 %v252
    %v312 = vunpack.c.l.b16 %v253
    %v313 = vunpack.c.h.b16 %v253
    %v314 = vpack.c.b16 %v284, %v282
    %v315 = vpack.c.b16 %v285, %v283
    %v316 = vpack.c.b16 %v288, %v286
    %v317 = vpack.c.b16 %v289, %v287
    %v318 = vpack.c.b16 %v292, %v290
    %v319 = vpack.c.b16 %v293, %v291
    %v320 = vpack.c.b16 %v296, %v294
    %v321 = vpack.c.b16 %v297, %v295
    %v322 = vpack.c.b16 %v300, %v298
    %v323 = vpack.c.b16 %v301, %v299
    %v324 = vpack.c.b16 %v304, %v302
    %v325 = vpack.c.b16 %v305, %v303
    %v326 = vpack.c.b16 %v308, %v306
    %v327 = vpack.c.b16 %v309, %v307
    %v328 = vpack.c.b16 %v312, %v310
    %v329 = vpack.c.b16 %v313, %v311
    %346 = vmatprep.subr.bf16.mxu0 %v315
    %347 = vmatpush1.bf16.msra.mxu0 %v314
    %348 = vmatprep.subr.bf16.mxu0 %v317
    %349 = vmatpush1.bf16.msra.mxu0 %v316
    %350 = vmatprep.subr.bf16.mxu0 %v319
    %351 = vmatpush1.bf16.msra.mxu0 %v318
    %352 = vmatprep.subr.bf16.mxu0 %v321
    %353 = vmatpush1.bf16.msra.mxu0 %v320
    %354 = vmatprep.subr.bf16.mxu0 %v323
    %355 = vmatpush1.bf16.msra.mxu0 %v322
    %356 = vmatprep.subr.bf16.mxu0 %v325
    %357 = vmatpush1.bf16.msra.mxu0 %v324
    %358 = vmatprep.subr.bf16.mxu0 %v327
    %359 = vmatpush1.bf16.msra.mxu0 %v326
    %360 = vmatprep.subr.bf16.mxu0 %v329
    %361 = vmatpush1.bf16.msra.mxu0 %v328
    %362 = vmatprep.subr.bf16.mxu0 0
    %363 = vmatpush1.bf16.msra.mxu0 0
    %364 = vmatprep.subr.bf16.mxu0 0
    %365 = vmatpush1.bf16.msra.mxu0 0
    %366 = vmatprep.subr.bf16.mxu0 0
    %367 = vmatpush1.bf16.msra.mxu0 0
    %368 = vmatprep.subr.bf16.mxu0 0
    %369 = vmatpush1.bf16.msra.mxu0 0
    %370 = vmatprep.subr.bf16.mxu0 0
    %371 = vmatpush1.bf16.msra.mxu0 0
    %372 = vmatprep.subr.bf16.mxu0 0
    %373 = vmatpush1.bf16.msra.mxu0 0
    %374 = vmatprep.subr.bf16.mxu0 0
    %375 = vmatpush1.bf16.msra.mxu0 0
    %376 = vmatprep.subr.bf16.mxu0 0
    %377 = vmatpush1.bf16.msra.mxu0 0
    %378 = vmatprep.mubr.bf16.mxu0 0
    %379 = vmatmul.mubr.bf16.gmra.mrb[0].mxu0 %v237
    %v380 = vpop.f32.mrb[0].mxu0
    %v381 = vadd.f32 %v259, %v380
    %v382 = vpop.f32.mrb[0].mxu0
    %v383 = vadd.f32 %v263, %v382
    %v384 = vpop.f32.mrb[0].mxu0
    %v385 = vadd.f32 %v259, %v384
    %v386 = vpop.f32.mrb[0].mxu0
    %v387 = vadd.f32 %v263, %v386
    %388 = vdwg.mxu0
    %389 = vst [vmem:[#allocation9] sm:$0xff] %v381
    %390 = vst [vmem:[#allocation9 + $0x8] sm:$0xff] %v383
    %391 = vst [vmem:[#allocation9 + $0x10] sm:$0xff] %v385
    %392 = vst [vmem:[#allocation9 + $0x18] sm:$0xff] %v387
    // Predicated region
    $region46: #{tpu_custom_call.1} parent=1 // pred_check
      _
    $region47: #{tpu_custom_call.1} parent=1 // pred_check_branch
      %394 = sbr.rel (0) target = $region49
    $region48: #{tpu_custom_call.1} parent=1 // pred_region
      %s396 = ssub.s32 512, 512
      %397 = vsyncadd [#allocation5], %s396
      %s398 = sshll.u32 [#allocation9], 4
      %s399 = int_to_ptr.vmem [resolvable:$true] %s398
      %404 = dma.vmem_to_hbm [thread:$0]  %s399, 512, %s7, [#allocation5], 256, 256, 16
    $region49: #{tpu_custom_call.1} parent=1 // pred_fallthru
      _
    // Predicated region
    $region50: #{tpu_custom_call.1} parent=1 // pred_check
      _
    $region51: #{tpu_custom_call.1} parent=1 // pred_check_branch
      %406 = sbr.rel (0) target = $region53
    $region52: #{tpu_custom_call.1} parent=1 // pred_region
      %407 = dma.done [#allocation5], 512
    $region53: #{tpu_custom_call.1} parent=1 // pred_fallthru
      _
    %408 = vsyncpa [#allocation4], 1
    %409 = vsyncpa [#allocation7], 1
    %410 = vsyncpa [#allocation5], 1

// kernel: tpu_custom_call.1
$region0: #{tpu_custom_call.1}
  #allocation0 [shape = 'u32[]', space=smem, size = 0x4, offset = 0x4, fixed_abs, tag = 'smem constant byte address 0x4 - core index']
  #allocation1 [shape = 'u32[144,128]{1,0:T(1,128)}', space=vmem, size = 0x12000, scoped, tag = 'internal scratch']
  #allocation2 [shape = 'bf16[16,128]{1,0:T(16,128)(2,1)}', space=vmem, size = 0x1000, scoped, tag = 'scratch operand']
  %s0 = inlined_call_operand.hbm [shape: bf16[16,128], index: 0, kind: input, shape index: {}]
  %s1 = inlined_call_operand.hbm [shape: bf16[128,128], index: 1, kind: input, shape index: {}]
  %s2 = inlined_call_operand.vmem [shape: f32[1,128], index: 2, kind: input, shape index: {}]
  %s3 = inlined_call_operand.vmem [shape: f32[1,128], index: 3, kind: input, shape index: {}]
  %s4 = inlined_call_operand.vmem [shape: f32[1,128], index: 4, kind: input, shape index: {}]
  %s5 = inlined_call_operand.hbm [shape: bf16[128,256], index: 5, kind: input, shape index: {}]
  %s6 = inlined_call_operand.vmem [shape: f32[1,256], index: 6, kind: input, shape index: {}]
  %s7 = inlined_call_operand.hbm [shape: f32[16,256], index: 7, kind: output, shape index: {}]
  %s8 = sld [smem:[#allocation0]]
  $region54: #{tpu_custom_call.1} parent=0
    _
  %s10 = ssub.s32 1, %s8
  %s11 = scalar_select 0, %s10, %s8
  $region1: #{tpu_custom_call.1} parent=0
    #allocation3 [shape = 'u8[4096]{0}', space=vmem, size = 0x1000, scoped, tag = 'input window, operand 0, single buffered']
    #allocation4 [shape = 's32[1]{0}', space=sflag, size = 0x4, scoped, tag = 'scoped memory for tpu_custom_call.1']
    #allocation5 [shape = 's32[1]{0}', space=sflag, size = 0x4, scoped, tag = 'scoped memory for tpu_custom_call.1']
    #allocation6 [shape = 'u8[32768]{0}', space=vmem, size = 0x8000, scoped, tag = 'input window, operand 1, single buffered']
    #allocation7 [shape = 's32[1]{0}', space=sflag, size = 0x4, scoped, tag = 'scoped memory for tpu_custom_call.1']
    #allocation8 [shape = 'u8[65536]{0}', space=vmem, size = 0x10000, scoped, tag = 'input window, operand 5, single buffered']
    #allocation9 [shape = 'u8[16384]{0}', space=vmem, size = 0x4000, scoped, tag = 'output window, operand 0, single buffered']
    %12 = vsyncpa [#allocation4], 0
    %13 = vsyncpa [#allocation7], 0
    %14 = vsyncpa [#allocation5], 0
    // Predicated region
    $region2: #{tpu_custom_call.1} parent=1 // pred_check
      _
    $region3: #{tpu_custom_call.1} parent=1 // pred_check_branch
      %16 = sbr.rel (0) target = $region5
    $region4: #{tpu_custom_call.1} parent=1 // pred_region
      %s18 = ssub.s32 128, 128
      %19 = vsyncadd [#allocation4], %s18
      %s20 = sshll.u32 [#allocation3], 4
      %s21 = int_to_ptr.vmem [resolvable:$true] %s20
      %26 = dma.hbm_to_vmem [thread:$0]  %s0, 128, %s21, [#allocation4], 64, 64, 4
    $region5: #{tpu_custom_call.1} parent=1 // pred_fallthru
      _
    // Predicated region
    $region6: #{tpu_custom_call.1} parent=1 // pred_check
      _
    $region7: #{tpu_custom_call.1} parent=1 // pred_check_branch
      %28 = sbr.rel (0) target = $region9
    $region8: #{tpu_custom_call.1} parent=1 // pred_region
      %s30 = ssub.s32 1024, 1024
      %31 = vsyncadd [#allocation7], %s30
      %s32 = sshll.u32 [#allocation6], 4
      %s33 = int_to_ptr.vmem [resolvable:$true] %s32
      %38 = dma.hbm_to_vmem [thread:$0]  %s1, 1024, %s33, [#allocation7], 64, 64, 4
    $region9: #{tpu_custom_call.1} parent=1 // pred_fallthru
      _
    // Predicated region
    $region10: #{tpu_custom_call.1} parent=1 // pred_check
      _
    $region11: #{tpu_custom_call.1} parent=1 // pred_check_branch
      %40 = sbr.rel (0) target = $region13
    $region12: #{tpu_custom_call.1} parent=1 // pred_region
      _
    $region13: #{tpu_custom_call.1} parent=1 // pred_fallthru
      _
    // Predicated region
    $region14: #{tpu_custom_call.1} parent=1 // pred_check
      _
    $region15: #{tpu_custom_call.1} parent=1 // pred_check_branch
      %42 = sbr.rel (0) target = $region17
    $region16: #{tpu_custom_call.1} parent=1 // pred_region
      _
    $region17: #{tpu_custom_call.1} parent=1 // pred_fallthru
      _
    // Predicated region
    $region18: #{tpu_custom_call.1} parent=1 // pred_check
      _
    $region19: #{tpu_custom_call.1} parent=1 // pred_check_branch
      %44 = sbr.rel (0) target = $region21
    $region20: #{tpu_custom_call.1} parent=1 // pred_region
      _
    $region21: #{tpu_custom_call.1} parent=1 // pred_fallthru
      _
    // Predicated region
    $region22: #{tpu_custom_call.1} parent=1 // pred_check
      _
    $region23: #{tpu_custom_call.1} parent=1 // pred_check_branch
      %46 = sbr.rel (0) target = $region25
    $region24: #{tpu_custom_call.1} parent=1 // pred_region
      %s48 = ssub.s32 2048, 2048
      %49 = vsyncadd [#allocation7], %s48
      %s50 = sshll.u32 [#allocation8], 4
      %s51 = int_to_ptr.vmem [resolvable:$true] %s50
      %56 = dma.hbm_to_vmem [thread:$0]  %s5, 2048, %s51, [#allocation7], 128, 128, 8
    $region25: #{tpu_custom_call.1} parent=1 // pred_fallthru
      _
    // Predicated region
    $region26: #{tpu_custom_call.1} parent=1 // pred_check
      _
    $region27: #{tpu_custom_call.1} parent=1 // pred_check_branch
      %58 = sbr.rel (0) target = $region29
    $region28: #{tpu_custom_call.1} parent=1 // pred_region
      _
    $region29: #{tpu_custom_call.1} parent=1 // pred_fallthru
      _
    // Predicated region
    $region30: #{tpu_custom_call.1} parent=1 // pred_check
      _
    $region31: #{tpu_custom_call.1} parent=1 // pred_check_branch
      %60 = sbr.rel (0) target = $region33
    $region32: #{tpu_custom_call.1} parent=1 // pred_region
      %61 = dma.done [#allocation4], 128
    $region33: #{tpu_custom_call.1} parent=1 // pred_fallthru
      _
    // Predicated region
    $region34: #{tpu_custom_call.1} parent=1 // pred_check
      _
    $region35: #{tpu_custom_call.1} parent=1 // pred_check_branch
      %63 = sbr.rel (0) target = $region37
    $region36: #{tpu_custom_call.1} parent=1 // pred_region
      %64 = dma.done [#allocation7], 1024
    $region37: #{tpu_custom_call.1} parent=1 // pred_fallthru
      _
    // Predicated region
    $region38: #{tpu_custom_call.1} parent=1 // pred_check
      _
    $region39: #{tpu_custom_call.1} parent=1 // pred_check_branch
      %66 = sbr.rel (0) target = $region41
    $region40: #{tpu_custom_call.1} parent=1 // pred_region
      %67 = dma.done [#allocation7], 2048
    $region41: #{tpu_custom_call.1} parent=1 // pred_fallthru
      _
    %p69 = scmp.eq.s32.totalorder 0, 0
    // Predicated region
    $region42: #{tpu_custom_call.1} parent=1 // pred_check
      %p70 = pneg %p69
    $region43: #{tpu_custom_call.1} parent=1 // pred_check_branch
      %72 = sbr.rel (%p70) target = $region45
    $region44: #{tpu_custom_call.1} parent=1 // pred_region
      %v73 = vld [vmem:[#allocation3] sm:$0xf]
      %v74 = vld [vmem:[#allocation3 + $0x4] sm:$0xf]
      %v75 = vld [vmem:[#allocation6] sm:$0xf]
      %v76 = vld [vmem:[#allocation6 + $0x4] sm:$0xf]
      %v77 = vld [vmem:[#allocation6 + $0x8] sm:$0xf]
      %v78 = vld [vmem:[#allocation6 + $0xc] sm:$0xf]
      %v79 = vld [vmem:[#allocation6 + $0x10] sm:$0xf]
      %v80 = vld [vmem:[#allocation6 + $0x14] sm:$0xf]
      %v81 = vld [vmem:[#allocation6 + $0x18] sm:$0xf]
      %v82 = vld [vmem:[#allocation6 + $0x1c] sm:$0xf]
      %v83 = vld [vmem:[#allocation6 + $0x20] sm:$0xf]
      %v84 = vld [vmem:[#allocation6 + $0x24] sm:$0xf]
      %v85 = vld [vmem:[#allocation6 + $0x28] sm:$0xf]
      %v86 = vld [vmem:[#allocation6 + $0x2c] sm:$0xf]
      %v87 = vld [vmem:[#allocation6 + $0x30] sm:$0xf]
      %v88 = vld [vmem:[#allocation6 + $0x34] sm:$0xf]
      %v89 = vld [vmem:[#allocation6 + $0x38] sm:$0xf]
      %v90 = vld [vmem:[#allocation6 + $0x3c] sm:$0xf]
      %v91 = vld [vmem:[%s2] sm:$0x1]
      %v93 = vlaneseq
      %v94 = vshrl.u32 %v93, 7
      %v95 = vsub.s32 0, %v94
      %v96 = vrot.slane %v91, %v95
      %v100 = vunpack.c.l.b16 %v73
      %v101 = vunpack.c.l.b16 %v74
      %v102 = vpack.c.b16 %v101, %v100
      %v120 = vunpack.c.l.b16 %v75
      %v121 = vunpack.c.l.b16 %v76
      %v122 = vunpack.c.l.b16 %v77
      %v123 = vunpack.c.l.b16 %v78
      %v124 = vunpack.c.l.b16 %v79
      %v125 = vunpack.c.l.b16 %v80
      %v126 = vunpack.c.l.b16 %v81
      %v127 = vunpack.c.l.b16 %v82
      %v128 = vunpack.c.l.b16 %v83
      %v129 = vunpack.c.l.b16 %v84
      %v130 = vunpack.c.l.b16 %v85
      %v131 = vunpack.c.l.b16 %v86
      %v132 = vunpack.c.l.b16 %v87
      %v133 = vunpack.c.l.b16 %v88
      %v134 = vunpack.c.l.b16 %v89
      %v135 = vunpack.c.l.b16 %v90
      %v136 = vpack.c.b16 %v121, %v120
      %v137 = vpack.c.b16 %v123, %v122
      %v138 = vpack.c.b16 %v125, %v124
      %v139 = vpack.c.b16 %v127, %v126
      %v140 = vpack.c.b16 %v129, %v128
      %v141 = vpack.c.b16 %v131, %v130
      %v142 = vpack.c.b16 %v133, %v132
      %v143 = vpack.c.b16 %v135, %v134
      %152 = vmatprep.subr.bf16.mxu0 0
      %153 = vmatpush1.bf16.msra.mxu0 %v136
      %154 = vmatprep.subr.bf16.mxu0 0
      %155 = vmatpush1.bf16.msra.mxu0 %v137
      %156 = vmatprep.subr.bf16.mxu0 0
      %157 = vmatpush1.bf16.msra.mxu0 %v138
      %158 = vmatprep.subr.bf16.mxu0 0
      %159 = vmatpush1.bf16.msra.mxu0 %v139
      %160 = vmatprep.subr.bf16.mxu0 0
      %161 = vmatpush1.bf16.msra.mxu0 %v140
      %162 = vmatprep.subr.bf16.mxu0 0
      %163 = vmatpush1.bf16.msra.mxu0 %v141
      %164 = vmatprep.subr.bf16.mxu0 0
      %165 = vmatpush1.bf16.msra.mxu0 %v142
      %166 = vmatprep.subr.bf16.mxu0 0
      %167 = vmatpush1.bf16.msra.mxu0 %v143
      %168 = vmatprep.subr.bf16.mxu0 0
      %169 = vmatpush1.bf16.msra.mxu0 0
      %170 = vmatprep.subr.bf16.mxu0 0
      %171 = vmatpush1.bf16.msra.mxu0 0
      %172 = vmatprep.subr.bf16.mxu0 0
      %173 = vmatpush1.bf16.msra.mxu0 0
      %174 = vmatprep.subr.bf16.mxu0 0
      %175 = vmatpush1.bf16.msra.mxu0 0
      %176 = vmatprep.subr.bf16.mxu0 0
      %177 = vmatpush1.bf16.msra.mxu0 0
      %178 = vmatprep.subr.bf16.mxu0 0
      %179 = vmatpush1.bf16.msra.mxu0 0
      %180 = vmatprep.subr.bf16.mxu0 0
      %181 = vmatpush1.bf16.msra.mxu0 0
      %182 = vmatprep.subr.bf16.mxu0 0
      %183 = vmatpush1.bf16.msra.mxu0 0
      %184 = vmatprep.mubr.bf16.mxu0 0
      %185 = vmatmul.mubr.bf16.gmra.mrb[0].mxu0 %v102
      %v186 = vpop.f32.mrb[0].mxu0
      %v187 = vadd.f32 %v96, %v186
      %v188 = vpop.f32.mrb[0].mxu0
      %v189 = vpop.f32.mrb[0].mxu0
      %v190 = vadd.f32 %v96, %v189
      %v191 = vpop.f32.mrb[0].mxu0
      %192 = vdwg.mxu0
      %v193 = vmax.f32 %v187, 0.0
      %v194 = vmax.f32 %v190, 0.0
      %195 = vadd.xlane.f32.xlu0 %v193
      %v196 = vpop.xlane.xlu0 %195
      %197 = vadd.xlane.f32.xlu0 %v194
      %v198 = vpop.xlane.xlu0 %197
      %v199 = vmul.f32 %v196, 0.0078125
      %v200 = vmul.f32 %v198, 0.0078125
      %v201 = vsub.f32 %v193, %v199
      %v202 = vsub.f32 %v194, %v200
      %v203 = vmul.f32 %v201, %v201
      %v204 = vmul.f32 %v202, %v202
      %205 = vadd.xlane.f32.xlu0 %v203
      %v206 = vpop.xlane.xlu0 %205
      %207 = vadd.xlane.f32.xlu0 %v204
      %v208 = vpop.xlane.xlu0 %207
      %v209 = vmul.f32 %v206, 0.0078125
      %v210 = vmul.f32 %v208, 0.0078125
      %v211 = vadd.f32 %v209, 1e-05
      %v212 = vadd.f32 %v210, 1e-05
      %v213 = vrsqrt.pop %v211
      %v214 = vrsqrt.pop %v212
      %v215 = vmul.f32 %v201, %v213
      %v216 = vmul.f32 %v202, %v214
      %v217 = vld [vmem:[%s3] sm:$0x1]
      %v219 = vlaneseq
      %v220 = vshrl.u32 %v219, 7
      %v221 = vsub.s32 0, %v220
      %v222 = vrot.slane %v217, %v221
      %v224 = vmul.f32 %v215, %v222
      %v225 = vmul.f32 %v216, %v222
      %v226 = vld [vmem:[%s4] sm:$0x1]
      %v228 = vlaneseq
      %v229 = vshrl.u32 %v228, 7
      %v230 = vsub.s32 0, %v229
      %v231 = vrot.slane %v226, %v230
      %v233 = vadd.f32 %v224, %v231
      %v234 = vadd.f32 %v225, %v231
      %v235 = vpack.c.bf16 %v234, %v233
      %236 = vst [vmem:[#allocation2] sm:$0xff] %v235
    $region45: #{tpu_custom_call.1} parent=1 // pred_fallthru
      _
    %v237 = vld [vmem:[#allocation2] sm:$0xff]
    %v238 = vld [vmem:[#allocation8] sm:$0xff]
    %v239 = vld [vmem:[#allocation8 + $0x8] sm:$0xff]
    %v240 = vld [vmem:[#allocation8 + $0x10] sm:$0xff]
    %v241 = vld [vmem:[#allocation8 + $0x18] sm:$0xff]
    %v242 = vld [vmem:[#allocation8 + $0x20] sm:$0xff]
    %v243 = vld [vmem:[#allocation8 + $0x28] sm:$0xff]
    %v244 = vld [vmem:[#allocation8 + $0x30] sm:$0xff]
    %v245 = vld [vmem:[#allocation8 + $0x38] sm:$0xff]
    %v246 = vld [vmem:[#allocation8 + $0x40] sm:$0xff]
    %v247 = vld [vmem:[#allocation8 + $0x48] sm:$0xff]
    %v248 = vld [vmem:[#allocation8 + $0x50] sm:$0xff]
    %v249 = vld [vmem:[#allocation8 + $0x58] sm:$0xff]
    %v250 = vld [vmem:[#allocation8 + $0x60] sm:$0xff]
    %v251 = vld [vmem:[#allocation8 + $0x68] sm:$0xff]
    %v252 = vld [vmem:[#allocation8 + $0x70] sm:$0xff]
    %v253 = vld [vmem:[#allocation8 + $0x78] sm:$0xff]
    %v254 = vld [vmem:[%s6] sm:$0x3]
    %v256 = vlaneseq
    %v257 = vshrl.u32 %v256, 7
    %v258 = vsub.s32 0, %v257
    %v259 = vrot.slane %v254, %v258
    %v260 = vlaneseq
    %v261 = vshrl.u32 %v260, 7
    %v262 = vsub.s32 1, %v261
    %v263 = vrot.slane %v254, %v262
    %v282 = vunpack.c.l.b16 %v238
    %v283 = vunpack.c.h.b16 %v238
    %v284 = vunpack.c.l.b16 %v239
    %v285 = vunpack.c.h.b16 %v239
    %v286 = vunpack.c.l.b16 %v240
    %v287 = vunpack.c.h.b16 %v240
    %v288 = vunpack.c.l.b16 %v241
    %v289 = vunpack.c.h.b16 %v241
    %v290 = vunpack.c.l.b16 %v242
    %v291 = vunpack.c.h.b16 %v242
    %v292 = vunpack.c.l.b16 %v243
    %v293 = vunpack.c.h.b16 %v243
    %v294 = vunpack.c.l.b16 %v244
    %v295 = vunpack.c.h.b16 %v244
    %v296 = vunpack.c.l.b16 %v245
    %v297 = vunpack.c.h.b16 %v245
    %v298 = vunpack.c.l.b16 %v246
    %v299 = vunpack.c.h.b16 %v246
    %v300 = vunpack.c.l.b16 %v247
    %v301 = vunpack.c.h.b16 %v247
    %v302 = vunpack.c.l.b16 %v248
    %v303 = vunpack.c.h.b16 %v248
    %v304 = vunpack.c.l.b16 %v249
    %v305 = vunpack.c.h.b16 %v249
    %v306 = vunpack.c.l.b16 %v250
    %v307 = vunpack.c.h.b16 %v250
    %v308 = vunpack.c.l.b16 %v251
    %v309 = vunpack.c.h.b16 %v251
    %v310 = vunpack.c.l.b16 %v252
    %v311 = vunpack.c.h.b16 %v252
    %v312 = vunpack.c.l.b16 %v253
    %v313 = vunpack.c.h.b16 %v253
    %v314 = vpack.c.b16 %v284, %v282
    %v315 = vpack.c.b16 %v285, %v283
    %v316 = vpack.c.b16 %v288, %v286
    %v317 = vpack.c.b16 %v289, %v287
    %v318 = vpack.c.b16 %v292, %v290
    %v319 = vpack.c.b16 %v293, %v291
    %v320 = vpack.c.b16 %v296, %v294
    %v321 = vpack.c.b16 %v297, %v295
    %v322 = vpack.c.b16 %v300, %v298
    %v323 = vpack.c.b16 %v301, %v299
    %v324 = vpack.c.b16 %v304, %v302
    %v325 = vpack.c.b16 %v305, %v303
    %v326 = vpack.c.b16 %v308, %v306
    %v327 = vpack.c.b16 %v309, %v307
    %v328 = vpack.c.b16 %v312, %v310
    %v329 = vpack.c.b16 %v313, %v311
    %346 = vmatprep.subr.bf16.mxu0 %v315
    %347 = vmatpush1.bf16.msra.mxu0 %v314
    %348 = vmatprep.subr.bf16.mxu0 %v317
    %349 = vmatpush1.bf16.msra.mxu0 %v316
    %350 = vmatprep.subr.bf16.mxu0 %v319
    %351 = vmatpush1.bf16.msra.mxu0 %v318
    %352 = vmatprep.subr.bf16.mxu0 %v321
    %353 = vmatpush1.bf16.msra.mxu0 %v320
    %354 = vmatprep.subr.bf16.mxu0 %v323
    %355 = vmatpush1.bf16.msra.mxu0 %v322
    %356 = vmatprep.subr.bf16.mxu0 %v325
    %357 = vmatpush1.bf16.msra.mxu0 %v324
    %358 = vmatprep.subr.bf16.mxu0 %v327
    %359 = vmatpush1.bf16.msra.mxu0 %v326
    %360 = vmatprep.subr.bf16.mxu0 %v329
    %361 = vmatpush1.bf16.msra.mxu0 %v328
    %362 = vmatprep.subr.bf16.mxu0 0
    %363 = vmatpush1.bf16.msra.mxu0 0
    %364 = vmatprep.subr.bf16.mxu0 0
    %365 = vmatpush1.bf16.msra.mxu0 0
    %366 = vmatprep.subr.bf16.mxu0 0
    %367 = vmatpush1.bf16.msra.mxu0 0
    %368 = vmatprep.subr.bf16.mxu0 0
    %369 = vmatpush1.bf16.msra.mxu0 0
    %370 = vmatprep.subr.bf16.mxu0 0
    %371 = vmatpush1.bf16.msra.mxu0 0
    %372 = vmatprep.subr.bf16.mxu0 0
    %373 = vmatpush1.bf16.msra.mxu0 0
    %374 = vmatprep.subr.bf16.mxu0 0
    %375 = vmatpush1.bf16.msra.mxu0 0
    %376 = vmatprep.subr.bf16.mxu0 0
    %377 = vmatpush1.bf16.msra.mxu0 0
    %378 = vmatprep.mubr.bf16.mxu0 0
    %379 = vmatmul.mubr.bf16.gmra.mrb[0].mxu0 %v237
    %v380 = vpop.f32.mrb[0].mxu0
    %v381 = vadd.f32 %v259, %v380
    %v382 = vpop.f32.mrb[0].mxu0
    %v383 = vadd.f32 %v263, %v382
    %v384 = vpop.f32.mrb[0].mxu0
    %v385 = vadd.f32 %v259, %v384
    %v386 = vpop.f32.mrb[0].mxu0
    %v387 = vadd.f32 %v263, %v386
    %388 = vdwg.mxu0
    %389 = vst [vmem:[#allocation9] sm:$0xff] %v381
    %390 = vst [vmem:[#allocation9 + $0x8] sm:$0xff] %v383
    %391 = vst [vmem:[#allocation9 + $0x10] sm:$0xff] %v385
    %392 = vst [vmem:[#allocation9 + $0x18] sm:$0xff] %v387
    // Predicated region
    $region46: #{tpu_custom_call.1} parent=1 // pred_check
      _
    $region47: #{tpu_custom_call.1} parent=1 // pred_check_branch
      %394 = sbr.rel (0) target = $region49
    $region48: #{tpu_custom_call.1} parent=1 // pred_region
      %s396 = ssub.s32 512, 512
      %397 = vsyncadd [#allocation5], %s396
      %s398 = sshll.u32 [#allocation9], 4
      %s399 = int_to_ptr.vmem [resolvable:$true] %s398
      %404 = dma.vmem_to_hbm [thread:$0]  %s399, 512, %s7, [#allocation5], 256, 256, 16
    $region49: #{tpu_custom_call.1} parent=1 // pred_fallthru
      _
    // Predicated region
    $region50: #{tpu_custom_call.1} parent=1 // pred_check
      _
    $region51: #{tpu_custom_call.1} parent=1 // pred_check_branch
      %406 = sbr.rel (0) target = $region53
    $region52: #{tpu_custom_call.1} parent=1 // pred_region
      %407 = dma.done [#allocation5], 512
    $region53: #{tpu_custom_call.1} parent=1 // pred_fallthru
      _
    %408 = vsyncpa [#allocation4], 1
    %409 = vsyncpa [#allocation7], 1
    %410 = vsyncpa [#allocation5], 1

</llo_original>
